<compile_context>
chip_gen: v7x
topology: tpu7x:2x2x1
jax: 0.10.0
libtpu: 0.0.40
codegen_flags: <defaults>
</compile_context>

<pallas_src>
import functools

import jax
import jax.numpy as jnp
import numpy as np
from jax.experimental import pallas as pl
from jax.experimental.pallas import tpu as pltpu


# ----------------------------------------------------------------------------
# Fused kernel: pooler (q & p) -> block-diagonal scores -> cross-entropy loss.
# Inputs are pre-sliced CLS rows in bf16; all VPU/EUP math is f32.
# ----------------------------------------------------------------------------
def _fused_dense_kernel(q_cls_ref, p_cls_ref, w_ref, b_ref, g_ref, beta_ref,
                        loss_ref, scores_ref, q_reps_ref, p_reps_ref,
                        loss_acc_ref, *, n_passages):
    Bq = q_cls_ref.shape[0]
    D = w_ref.shape[1]

    # ---- 1) Shared (tied) pooler head.  The bf16 weight is resident in VMEM
    #         once; two MXU matmuls (no concat / split copies), f32 accum.
    def head(x_bf16):
        h = jnp.dot(x_bf16, w_ref[...],
                    preferred_element_type=jnp.float32) + b_ref[...]
        # LayerNorm over features, f32 on the VPU (torch default eps=1e-5).
        mu = jnp.mean(h, axis=-1, keepdims=True)
        var = jnp.mean((h - mu) * (h - mu), axis=-1, keepdims=True)
        return (h - mu) * jax.lax.rsqrt(var + 1e-5) * g_ref[...] + beta_ref[...]

    q_reps = head(q_cls_ref[...])                     # (Bq, D) f32
    p_reps = head(p_cls_ref[...])                     # (Bp, D) f32
    q_reps_ref[...] = q_reps
    p_reps_ref[...] = p_reps

    # ---- 2) Block-diagonal scores only (what the loss consumes):
    #         scores[i, j] = q_reps[i] . p_reps[i*n + j]
    #         Pure-VPU broadcast-multiply + lane reduce (FLOPs are trivial;
    #         avoids Bq tiny MXU push/pops and any concat/relayout).
    p3 = p_reps.reshape(Bq, n_passages, D)            # (Bq, n, D)
    q3 = q_reps[:, None, :]                           # (Bq, 1, D)
    scores = jnp.sum(q3 * p3, axis=-1)                # (Bq, n) f32

    # Lane-dense writeback: scores_ref is (Bq, >=128); fill then write the
    # live lanes.  The wrapper slices [:, :n_passages].
    scores_ref[...] = jnp.zeros_like(scores_ref)
    scores_ref[:, :n_passages] = scores

    # ---- 3) Mean cross-entropy with target label 0 (target_label buffer is
    #         all zeros in the torch module).  Max-shifted LSE, all f32.
    m = jnp.max(scores, axis=-1, keepdims=True)
    lse = m + jnp.log(jnp.sum(jnp.exp(scores - m), axis=-1, keepdims=True))
    losses = lse - scores[:, 0:1]                     # (Bq, 1)

    # Scalar loss goes out through SMEM (no 128-lane padded VMEM tile for a
    # single float).  Stage the (1,1) mean in VMEM, then a scalar store.
    loss_acc_ref[...] = jnp.mean(losses, keepdims=True)
    loss_ref[0, 0] = loss_acc_ref[0, 0]


# ----------------------------------------------------------------------------
# DenseModel forward (training branch, negatives_x_device=False).
# ----------------------------------------------------------------------------
def dense_model_forward(q_hidden, p_hidden, params, n_passages,
                        mxu_dtype=jnp.bfloat16):
    """q_hidden: (Bq, S, H), p_hidden: (Bp, S, H) -- backbone outputs.

    Returns (loss, scores, q_reps, p_reps) mirroring DenseOutput.
    """
    w, b, gamma, beta = params
    Bq = q_hidden.shape[0]
    Bp = p_hidden.shape[0]
    D = w.shape[1]
    assert Bp == Bq * n_passages, (
        f"passage batch {Bp} must equal queries {Bq} * train_n_passages "
        f"{n_passages}")

    # CLS pooling + bf16 cast OUTSIDE the kernel: only (B, H) bf16 rows are
    # DMA'd to VMEM (S x less traffic than shipping full hidden states).
    q_cls = q_hidden[:, 0, :].astype(mxu_dtype)       # (Bq, H) bf16
    p_cls = p_hidden[:, 0, :].astype(mxu_dtype)       # (Bp, H) bf16

    # Lane-dense score output width (multiple of 128).
    score_lanes = max(128, ((n_passages + 127) // 128) * 128)

    kernel = functools.partial(_fused_dense_kernel, n_passages=n_passages)
    vmem = pl.BlockSpec(memory_space=pltpu.MemorySpace.VMEM)
    smem = pl.BlockSpec(memory_space=pltpu.MemorySpace.SMEM)

    out_shape = (
        jax.ShapeDtypeStruct((1, 1), jnp.float32),              # loss (SMEM)
        jax.ShapeDtypeStruct((Bq, score_lanes), jnp.float32),   # scores (padded)
        jax.ShapeDtypeStruct((Bq, D), jnp.float32),             # q_reps
        jax.ShapeDtypeStruct((Bp, D), jnp.float32),             # p_reps
    )

    loss, scores_pad, q_reps, p_reps = pl.pallas_call(
        kernel,
        out_shape=out_shape,
        in_specs=[vmem] * 6,
        out_specs=(smem, vmem, vmem, vmem),
        scratch_shapes=[pltpu.VMEM((1, 1), jnp.float32)],
        # Explicit VMEM budget: v7x has 64 MiB physical VMEM (32 MiB scoped
        # default on v5e/v6e); stay well under it with headroom.
        compiler_params=pltpu.CompilerParams(vmem_limit_bytes=32 * 1024 * 1024),
    )(q_cls, p_cls,
      w.astype(mxu_dtype),                            # bf16 weight: halved DMA
      b.reshape(1, D).astype(jnp.float32),
      gamma.reshape(1, D).astype(jnp.float32),
      beta.reshape(1, D).astype(jnp.float32))

    scores = scores_pad[:, :n_passages]
    return loss[0, 0], scores, q_reps, p_reps


# ----------------------------------------------------------------------------
# Pure-JAX reference (for verification).  `mxu_dtype` emulates the kernel's
# matmul-input rounding (bf16 inputs, f32 accumulation); everything else f32.
# ----------------------------------------------------------------------------
def reference_forward(q_hidden, p_hidden, params, n_passages,
                      mxu_dtype=jnp.float32):
    w, b, gamma, beta = params
    f32 = jnp.float32
    hi = jax.lax.Precision.HIGHEST
    w_m = w.astype(mxu_dtype).astype(f32)

    def head(hidden):
        x = hidden[:, 0, :].astype(mxu_dtype).astype(f32)
        h = jnp.dot(x, w_m, precision=hi) + b
        mu = h.mean(-1, keepdims=True)
        var = ((h - mu) ** 2).mean(-1, keepdims=True)
        return (h - mu) / jnp.sqrt(var + 1e-5) * gamma + beta

    q_reps = head(q_hidden)
    p_reps = head(p_hidden)

    # Scores from the f32 reps (same as the kernel's f32 VPU math).
    scores_full = jnp.dot(q_reps, p_reps.T, precision=hi)       # (Bq, Bp)
    Bq = q_reps.shape[0]
    idx = (jnp.arange(Bq)[:, None] * n_passages
           + jnp.arange(n_passages)[None, :])
    scores = jnp.take_along_axis(scores_full, idx, axis=1)      # (Bq, n)

    lse = jax.scipy.special.logsumexp(scores, axis=-1)
    loss = jnp.mean(lse - scores[:, 0])
    return loss, scores, q_reps, p_reps


if __name__ == "__main__":
    # Small shapes consistent with the module's forward:
    #   per_device_train_batch_size = 2 queries, train_n_passages = 4
    #   (so 8 passages); backbone hidden = 128; projection dim = 768
    #   (hardcoded in AnceEncoder / LinearPooler); seq = 8.
    Bq, n_psg, S, H, D = 2, 4, 8, 128, 768
    Bp = Bq * n_psg

    key = jax.random.PRNGKey(0)
    k1, k2, k3 = jax.random.split(key, 3)

    q_hidden = jax.random.normal(k1, (Bq, S, H), dtype=jnp.float32)
    p_hidden = jax.random.normal(k2, (Bp, S, H), dtype=jnp.float32)

    # Deterministic param init (AnceEncoder._init_weights semantics):
    #   Linear.weight ~ N(0, 0.02), Linear.bias = 0, LN.weight = 1, LN.bias = 0.
    w = 0.02 * jax.random.normal(k3, (H, D), dtype=jnp.float32)
    b = jnp.zeros((D,), dtype=jnp.float32)
    gamma = jnp.ones((D,), dtype=jnp.float32)
    beta = jnp.zeros((D,), dtype=jnp.float32)
    params = (w, b, gamma, beta)

    fwd = jax.jit(functools.partial(dense_model_forward, n_passages=n_psg))
    loss, scores, q_reps, p_reps = fwd(q_hidden, p_hidden, params)
    jax.block_until_ready((loss, scores, q_reps, p_reps))

    # Reference that matches the kernel's precision policy (bf16 MXU inputs,
    # f32 accumulation / LayerNorm / scores / CE).
    ref_loss, ref_scores, ref_q, ref_p = reference_forward(
        q_hidden, p_hidden, params, n_psg, mxu_dtype=jnp.bfloat16)

    assert np.allclose(np.asarray(q_reps), np.asarray(ref_q),
                       atol=1e-3, rtol=1e-3)
    assert np.allclose(np.asarray(p_reps), np.asarray(ref_p),
                       atol=1e-3, rtol=1e-3)
    assert np.allclose(np.asarray(scores), np.asarray(ref_scores),
                       atol=5e-2, rtol=5e-3)
    assert np.allclose(float(loss), float(ref_loss), atol=5e-2, rtol=5e-3)

    # Loose sanity check vs a full-f32 reference: bf16 MXU inputs keep the
    # LayerNorm'd representations within ~1e-2 of pure f32.
    _, _, f32_q, f32_p = reference_forward(
        q_hidden, p_hidden, params, n_psg, mxu_dtype=jnp.float32)
    assert np.allclose(np.asarray(q_reps), np.asarray(f32_q), atol=1e-1)
    assert np.allclose(np.asarray(p_reps), np.asarray(f32_p), atol=1e-1)

    print("KERNEL_OK")
</pallas_src>

<mosaic_0001>
module attributes {stable_mosaic.version = 11 : i64} {
  func.func @_fused_dense_kernel(%arg0: memref<2x128xbf16, #tpu.memory_space<vmem>>, %arg1: memref<8x128xbf16, #tpu.memory_space<vmem>>, %arg2: memref<128x768xbf16, #tpu.memory_space<vmem>>, %arg3: memref<1x768xf32, #tpu.memory_space<vmem>>, %arg4: memref<1x768xf32, #tpu.memory_space<vmem>>, %arg5: memref<1x768xf32, #tpu.memory_space<vmem>>, %arg6: memref<1x1xf32, #tpu.memory_space<smem>>, %arg7: memref<2x128xf32, #tpu.memory_space<vmem>>, %arg8: memref<2x768xf32, #tpu.memory_space<vmem>>, %arg9: memref<8x768xf32, #tpu.memory_space<vmem>>, %arg10: memref<1x1xf32, #tpu.memory_space<vmem>>) attributes {dimension_semantics = [], scalar_prefetch = 0 : i64, scratch_operands = 1 : i64, tpu.core_type = #tpu.core_type<tc>} {
    %c0 = arith.constant 0 : index
    %c0_0 = arith.constant 0 : index
    %0 = vector.load %arg0[%c0, %c0_0] : memref<2x128xbf16, #tpu.memory_space<vmem>>, vector<2x128xbf16>
    %c0_1 = arith.constant 0 : index
    %c0_2 = arith.constant 0 : index
    %1 = vector.load %arg2[%c0_1, %c0_2] : memref<128x768xbf16, #tpu.memory_space<vmem>>, vector<128x768xbf16>
    %cst = arith.constant dense<0.000000e+00> : vector<2x768xf32>
    %2 = tpu.matmul %0, %1, %cst {dimension_numbers = #tpu.dot_dimension_numbers<[1], [0], [0], [1], [0, 0, 1, 1], [], []>} : vector<2x128xbf16>, vector<128x768xbf16>, vector<2x768xf32> -> vector<2x768xf32>
    %c0_3 = arith.constant 0 : index
    %c0_4 = arith.constant 0 : index
    %3 = vector.load %arg3[%c0_3, %c0_4] : memref<1x768xf32, #tpu.memory_space<vmem>>, vector<1x768xf32>
    %4 = vector.broadcast %3 : vector<1x768xf32> to vector<2x768xf32>
    %5 = arith.addf %2, %4 : vector<2x768xf32>
    %cst_5 = arith.constant dense<0.000000e+00> : vector<2xf32>
    %6 = vector.multi_reduction <add>, %5, %cst_5 [1] : vector<2x768xf32> to vector<2xf32>
    %7 = vector.shape_cast %6 : vector<2xf32> to vector<2x1xf32>
    %cst_6 = arith.constant 7.680000e+02 : f32
    %8 = vector.broadcast %cst_6 : f32 to vector<2x1xf32>
    %9 = arith.divf %7, %8 : vector<2x1xf32>
    %10 = vector.broadcast %9 : vector<2x1xf32> to vector<2x768xf32>
    %11 = arith.subf %5, %10 : vector<2x768xf32>
    %12 = vector.broadcast %9 : vector<2x1xf32> to vector<2x768xf32>
    %13 = arith.subf %5, %12 : vector<2x768xf32>
    %14 = arith.mulf %11, %13 : vector<2x768xf32>
    %cst_7 = arith.constant dense<0.000000e+00> : vector<2xf32>
    %15 = vector.multi_reduction <add>, %14, %cst_7 [1] : vector<2x768xf32> to vector<2xf32>
    %16 = vector.shape_cast %15 : vector<2xf32> to vector<2x1xf32>
    %cst_8 = arith.constant 7.680000e+02 : f32
    %17 = vector.broadcast %cst_8 : f32 to vector<2x1xf32>
    %18 = arith.divf %16, %17 : vector<2x1xf32>
    %19 = vector.broadcast %9 : vector<2x1xf32> to vector<2x768xf32>
    %20 = arith.subf %5, %19 : vector<2x768xf32>
    %cst_9 = arith.constant 9.99999974E-6 : f32
    %21 = vector.broadcast %cst_9 : f32 to vector<2x1xf32>
    %22 = arith.addf %18, %21 : vector<2x1xf32>
    %23 = math.rsqrt %22 : vector<2x1xf32>
    %24 = vector.broadcast %23 : vector<2x1xf32> to vector<2x768xf32>
    %25 = arith.mulf %20, %24 : vector<2x768xf32>
    %c0_10 = arith.constant 0 : index
    %c0_11 = arith.constant 0 : index
    %26 = vector.load %arg4[%c0_10, %c0_11] : memref<1x768xf32, #tpu.memory_space<vmem>>, vector<1x768xf32>
    %27 = vector.broadcast %26 : vector<1x768xf32> to vector<2x768xf32>
    %28 = arith.mulf %25, %27 : vector<2x768xf32>
    %c0_12 = arith.constant 0 : index
    %c0_13 = arith.constant 0 : index
    %29 = vector.load %arg5[%c0_12, %c0_13] : memref<1x768xf32, #tpu.memory_space<vmem>>, vector<1x768xf32>
    %30 = vector.broadcast %29 : vector<1x768xf32> to vector<2x768xf32>
    %31 = arith.addf %28, %30 : vector<2x768xf32>
    %c0_14 = arith.constant 0 : index
    %c0_15 = arith.constant 0 : index
    %32 = vector.load %arg1[%c0_14, %c0_15] : memref<8x128xbf16, #tpu.memory_space<vmem>>, vector<8x128xbf16>
    %c0_16 = arith.constant 0 : index
    %c0_17 = arith.constant 0 : index
    %33 = vector.load %arg2[%c0_16, %c0_17] : memref<128x768xbf16, #tpu.memory_space<vmem>>, vector<128x768xbf16>
    %cst_18 = arith.constant dense<0.000000e+00> : vector<8x768xf32>
    %34 = tpu.matmul %32, %33, %cst_18 {dimension_numbers = #tpu.dot_dimension_numbers<[1], [0], [0], [1], [0, 0, 1, 1], [], []>} : vector<8x128xbf16>, vector<128x768xbf16>, vector<8x768xf32> -> vector<8x768xf32>
    %c0_19 = arith.constant 0 : index
    %c0_20 = arith.constant 0 : index
    %35 = vector.load %arg3[%c0_19, %c0_20] : memref<1x768xf32, #tpu.memory_space<vmem>>, vector<1x768xf32>
    %36 = vector.broadcast %35 : vector<1x768xf32> to vector<8x768xf32>
    %37 = arith.addf %34, %36 : vector<8x768xf32>
    %cst_21 = arith.constant dense<0.000000e+00> : vector<8xf32>
    %38 = vector.multi_reduction <add>, %37, %cst_21 [1] : vector<8x768xf32> to vector<8xf32>
    %39 = vector.shape_cast %38 : vector<8xf32> to vector<8x1xf32>
    %cst_22 = arith.constant 7.680000e+02 : f32
    %40 = vector.broadcast %cst_22 : f32 to vector<8x1xf32>
    %41 = arith.divf %39, %40 : vector<8x1xf32>
    %42 = vector.broadcast %41 : vector<8x1xf32> to vector<8x768xf32>
    %43 = arith.subf %37, %42 : vector<8x768xf32>
    %44 = vector.broadcast %41 : vector<8x1xf32> to vector<8x768xf32>
    %45 = arith.subf %37, %44 : vector<8x768xf32>
    %46 = arith.mulf %43, %45 : vector<8x768xf32>
    %cst_23 = arith.constant dense<0.000000e+00> : vector<8xf32>
    %47 = vector.multi_reduction <add>, %46, %cst_23 [1] : vector<8x768xf32> to vector<8xf32>
    %48 = vector.shape_cast %47 : vector<8xf32> to vector<8x1xf32>
    %cst_24 = arith.constant 7.680000e+02 : f32
    %49 = vector.broadcast %cst_24 : f32 to vector<8x1xf32>
    %50 = arith.divf %48, %49 : vector<8x1xf32>
    %51 = vector.broadcast %41 : vector<8x1xf32> to vector<8x768xf32>
    %52 = arith.subf %37, %51 : vector<8x768xf32>
    %cst_25 = arith.constant 9.99999974E-6 : f32
    %53 = vector.broadcast %cst_25 : f32 to vector<8x1xf32>
    %54 = arith.addf %50, %53 : vector<8x1xf32>
    %55 = math.rsqrt %54 : vector<8x1xf32>
    %56 = vector.broadcast %55 : vector<8x1xf32> to vector<8x768xf32>
    %57 = arith.mulf %52, %56 : vector<8x768xf32>
    %c0_26 = arith.constant 0 : index
    %c0_27 = arith.constant 0 : index
    %58 = vector.load %arg4[%c0_26, %c0_27] : memref<1x768xf32, #tpu.memory_space<vmem>>, vector<1x768xf32>
    %59 = vector.broadcast %58 : vector<1x768xf32> to vector<8x768xf32>
    %60 = arith.mulf %57, %59 : vector<8x768xf32>
    %c0_28 = arith.constant 0 : index
    %c0_29 = arith.constant 0 : index
    %61 = vector.load %arg5[%c0_28, %c0_29] : memref<1x768xf32, #tpu.memory_space<vmem>>, vector<1x768xf32>
    %62 = vector.broadcast %61 : vector<1x768xf32> to vector<8x768xf32>
    %63 = arith.addf %60, %62 : vector<8x768xf32>
    %c0_30 = arith.constant 0 : index
    %c0_31 = arith.constant 0 : index
    %64 = vector.load %arg8[%c0_30, %c0_31] : memref<2x768xf32, #tpu.memory_space<vmem>>, vector<2x768xf32>
    tpu.vector_store %arg8[%c0_30, %c0_31], %31 {strides = array<i32>} : memref<2x768xf32, #tpu.memory_space<vmem>>, vector<2x768xf32>,
    %c0_32 = arith.constant 0 : index
    %c0_33 = arith.constant 0 : index
    %65 = vector.load %arg9[%c0_32, %c0_33] : memref<8x768xf32, #tpu.memory_space<vmem>>, vector<8x768xf32>
    tpu.vector_store %arg9[%c0_32, %c0_33], %63 {strides = array<i32>} : memref<8x768xf32, #tpu.memory_space<vmem>>, vector<8x768xf32>,
    %66 = vector.shape_cast %63 : vector<8x768xf32> to vector<2x4x768xf32>
    %67 = vector.shape_cast %31 : vector<2x768xf32> to vector<2x1x768xf32>
    %68 = vector.broadcast %67 : vector<2x1x768xf32> to vector<2x4x768xf32>
    %69 = arith.mulf %68, %66 : vector<2x4x768xf32>
    %cst_34 = arith.constant dense<0.000000e+00> : vector<2x4xf32>
    %70 = vector.multi_reduction <add>, %69, %cst_34 [2] : vector<2x4x768xf32> to vector<2x4xf32>
    %cst_35 = arith.constant 0.000000e+00 : f32
    %71 = vector.broadcast %cst_35 : f32 to vector<2x128xf32>
    %c0_36 = arith.constant 0 : index
    %c0_37 = arith.constant 0 : index
    %72 = vector.load %arg7[%c0_36, %c0_37] : memref<2x128xf32, #tpu.memory_space<vmem>>, vector<2x128xf32>
    tpu.vector_store %arg7[%c0_36, %c0_37], %71 {strides = array<i32>} : memref<2x128xf32, #tpu.memory_space<vmem>>, vector<2x128xf32>,
    %c0_38 = arith.constant 0 : index
    %c0_39 = arith.constant 0 : index
    %73 = vector.load %arg7[%c0_38, %c0_39] : memref<2x128xf32, #tpu.memory_space<vmem>>, vector<2x4xf32>
    tpu.vector_store %arg7[%c0_38, %c0_39], %70 {strides = array<i32>} : memref<2x128xf32, #tpu.memory_space<vmem>>, vector<2x4xf32>,
    %cst_40 = arith.constant dense<0xFF800000> : vector<2xf32>
    %74 = vector.multi_reduction <maximumf>, %70, %cst_40 [1] : vector<2x4xf32> to vector<2xf32>
    %75 = vector.shape_cast %74 : vector<2xf32> to vector<2x1xf32>
    %76 = vector.broadcast %75 : vector<2x1xf32> to vector<2x4xf32>
    %77 = arith.subf %70, %76 : vector<2x4xf32>
    %78 = math.exp %77 : vector<2x4xf32>
    %cst_41 = arith.constant dense<0.000000e+00> : vector<2xf32>
    %79 = vector.multi_reduction <add>, %78, %cst_41 [1] : vector<2x4xf32> to vector<2xf32>
    %80 = vector.shape_cast %79 : vector<2xf32> to vector<2x1xf32>
    %81 = math.log %80 : vector<2x1xf32>
    %82 = arith.addf %75, %81 : vector<2x1xf32>
    %83 = vector.extract_strided_slice %70 {offsets = [0, 0], sizes = [2, 1], strides = [1, 1]} : vector<2x4xf32> to vector<2x1xf32>
    %84 = arith.subf %82, %83 : vector<2x1xf32>
    %85 = vector.shape_cast %84 : vector<2x1xf32> to vector<1x2x1xf32>
    %cst_42 = arith.constant dense<0.000000e+00> : vector<1xf32>
    %86 = vector.multi_reduction <add>, %85, %cst_42 [1, 2] : vector<1x2x1xf32> to vector<1xf32>
    %87 = vector.shape_cast %86 : vector<1xf32> to vector<1x1x1xf32>
    %88 = vector.extract %87[0, 0, 0] : f32 from vector<1x1x1xf32>
    %89 = vector.broadcast %88 : f32 to vector<1x1xf32>
    %cst_43 = arith.constant 2.000000e+00 : f32
    %90 = vector.broadcast %cst_43 : f32 to vector<1x1xf32>
    %91 = arith.divf %89, %90 : vector<1x1xf32>
    %c0_44 = arith.constant 0 : index
    %c0_45 = arith.constant 0 : index
    %92 = vector.load %arg10[%c0_44, %c0_45] : memref<1x1xf32, #tpu.memory_space<vmem>>, vector<1x1xf32>
    tpu.vector_store %arg10[%c0_44, %c0_45], %91 {strides = array<i32>} : memref<1x1xf32, #tpu.memory_space<vmem>>, vector<1x1xf32>,
    %c0_46 = arith.constant 0 : index
    %c0_47 = arith.constant 0 : index
    %93 = vector.load %arg10[%c0_46, %c0_47] : memref<1x1xf32, #tpu.memory_space<vmem>>, vector<1x1xf32>
    %94 = vector.extract %93[0, 0] : f32 from vector<1x1xf32>
    %c0_48 = arith.constant 0 : index
    %c0_49 = arith.constant 0 : index
    %95 = memref.load %arg6[%c0_48, %c0_49] : memref<1x1xf32, #tpu.memory_space<smem>>
    memref.store %94, %arg6[%c0_48, %c0_49] : memref<1x1xf32, #tpu.memory_space<smem>>
    return
  }
}

</mosaic_0001>

<llo_original>
// kernel: dense_model_forward.1
$region0: #{dense_model_forward.1}
  #allocation0 [shape = 'u32[]', space=smem, size = 0x4, offset = 0x4, fixed_abs, tag = 'smem constant byte address 0x4 - core index']
  #allocation1 [shape = 'u32[144,128]{1,0:T(1,128)}', space=vmem, size = 0x12000, scoped, tag = 'internal scratch']
  #allocation2 [shape = 'f32[1,1]{1,0:T(1,128)}', space=vmem, size = 0x200, scoped, tag = 'scratch operand']
  %s0 = inlined_call_operand.vmem [shape: bf16[2,128], index: 0, kind: input, shape index: {}]
  %s1 = inlined_call_operand.vmem [shape: bf16[8,128], index: 1, kind: input, shape index: {}]
  %s2 = inlined_call_operand.vmem [shape: bf16[128,768], index: 2, kind: input, shape index: {}]
  %s3 = inlined_call_operand.vmem [shape: f32[1,768], index: 3, kind: input, shape index: {}]
  %s4 = inlined_call_operand.vmem [shape: f32[1,768], index: 4, kind: input, shape index: {}]
  %s5 = inlined_call_operand.vmem [shape: f32[1,768], index: 5, kind: input, shape index: {}]
  %s6 = inlined_call_operand.hbm [shape: f32[1,1], index: 6, kind: output, shape index: {0}]
  %s7 = inlined_call_operand.hbm [shape: f32[2,128], index: 7, kind: output, shape index: {1}]
  %s8 = inlined_call_operand.hbm [shape: f32[2,768], index: 8, kind: output, shape index: {2}]
  %s9 = inlined_call_operand.hbm [shape: f32[8,768], index: 9, kind: output, shape index: {3}]
  %10 = xla_tuple %s6, %s7, %s8, %s9
  %s11 = sld [smem:[#allocation0]]
  $region58: #{dense_model_forward.1} parent=0
    _
  %s13 = ssub.s32 1, %s11
  %s14 = scalar_select 0, %s13, %s11
  $region1: #{dense_model_forward.1} parent=0
    #allocation3 [shape = 'u8[512]{0}', space=smem, size = 0x200, scoped, tag = 'output window, operand 0, single buffered']
    #allocation4 [shape = 's32[1]{0}', space=sflag, size = 0x4, scoped, tag = 'scoped memory for dense_model_forward.1']
    #allocation5 [shape = 's32[1]{0}', space=sflag, size = 0x4, scoped, tag = 'scoped memory for dense_model_forward.1']
    #allocation6 [shape = 'u8[1024]{0}', space=vmem, size = 0x400, scoped, tag = 'output window, operand 1, single buffered']
    #allocation7 [shape = 'u8[6144]{0}', space=vmem, size = 0x1800, scoped, tag = 'output window, operand 2, single buffered']
    #allocation8 [shape = 's32[1]{0}', space=sflag, size = 0x4, scoped, tag = 'scoped memory for dense_model_forward.1']
    #allocation9 [shape = 'u8[24576]{0}', space=vmem, size = 0x6000, scoped, tag = 'output window, operand 3, single buffered']
    %15 = vsyncpa [#allocation5], 0
    %16 = vsyncpa [#allocation4], 0
    %17 = vsyncpa [#allocation8], 0
    // Predicated region
    $region2: #{dense_model_forward.1} parent=1 // pred_check
      _
    $region3: #{dense_model_forward.1} parent=1 // pred_check_branch
      %19 = sbr.rel (0) target = $region5
    $region4: #{dense_model_forward.1} parent=1 // pred_region
      _
    $region5: #{dense_model_forward.1} parent=1 // pred_fallthru
      _
    // Predicated region
    $region6: #{dense_model_forward.1} parent=1 // pred_check
      _
    $region7: #{dense_model_forward.1} parent=1 // pred_check_branch
      %21 = sbr.rel (0) target = $region9
    $region8: #{dense_model_forward.1} parent=1 // pred_region
      _
    $region9: #{dense_model_forward.1} parent=1 // pred_fallthru
      _
    // Predicated region
    $region10: #{dense_model_forward.1} parent=1 // pred_check
      _
    $region11: #{dense_model_forward.1} parent=1 // pred_check_branch
      %23 = sbr.rel (0) target = $region13
    $region12: #{dense_model_forward.1} parent=1 // pred_region
      _
    $region13: #{dense_model_forward.1} parent=1 // pred_fallthru
      _
    // Predicated region
    $region14: #{dense_model_forward.1} parent=1 // pred_check
      _
    $region15: #{dense_model_forward.1} parent=1 // pred_check_branch
      %25 = sbr.rel (0) target = $region17
    $region16: #{dense_model_forward.1} parent=1 // pred_region
      _
    $region17: #{dense_model_forward.1} parent=1 // pred_fallthru
      _
    // Predicated region
    $region18: #{dense_model_forward.1} parent=1 // pred_check
      _
    $region19: #{dense_model_forward.1} parent=1 // pred_check_branch
      %27 = sbr.rel (0) target = $region21
    $region20: #{dense_model_forward.1} parent=1 // pred_region
      _
    $region21: #{dense_model_forward.1} parent=1 // pred_fallthru
      _
    // Predicated region
    $region22: #{dense_model_forward.1} parent=1 // pred_check
      _
    $region23: #{dense_model_forward.1} parent=1 // pred_check_branch
      %29 = sbr.rel (0) target = $region25
    $region24: #{dense_model_forward.1} parent=1 // pred_region
      _
    $region25: #{dense_model_forward.1} parent=1 // pred_fallthru
      _
    %v31 = vld [vmem:[%s0] sm:$0x1]
    %v32 = vld [vmem:[%s2] sm:$0xff]
    %v33 = vld [vmem:[%s2 + $0x8] sm:$0xff]
    %v34 = vld [vmem:[%s2 + $0x10] sm:$0xff]
    %v35 = vld [vmem:[%s2 + $0x18] sm:$0xff]
    %v36 = vld [vmem:[%s2 + $0x20] sm:$0xff]
    %v37 = vld [vmem:[%s2 + $0x28] sm:$0xff]
    %v38 = vld [vmem:[%s2 + $0x30] sm:$0xff]
    %v39 = vld [vmem:[%s2 + $0x38] sm:$0xff]
    %v40 = vld [vmem:[%s2 + $0x40] sm:$0xff]
    %v41 = vld [vmem:[%s2 + $0x48] sm:$0xff]
    %v42 = vld [vmem:[%s2 + $0x50] sm:$0xff]
    %v43 = vld [vmem:[%s2 + $0x58] sm:$0xff]
    %v44 = vld [vmem:[%s2 + $0x60] sm:$0xff]
    %v45 = vld [vmem:[%s2 + $0x68] sm:$0xff]
    %v46 = vld [vmem:[%s2 + $0x70] sm:$0xff]
    %v47 = vld [vmem:[%s2 + $0x78] sm:$0xff]
    %v48 = vld [vmem:[%s2 + $0x80] sm:$0xff]
    %v49 = vld [vmem:[%s2 + $0x88] sm:$0xff]
    %v50 = vld [vmem:[%s2 + $0x90] sm:$0xff]
    %v51 = vld [vmem:[%s2 + $0x98] sm:$0xff]
    %v52 = vld [vmem:[%s2 + $0xa0] sm:$0xff]
    %v53 = vld [vmem:[%s2 + $0xa8] sm:$0xff]
    %v54 = vld [vmem:[%s2 + $0xb0] sm:$0xff]
    %v55 = vld [vmem:[%s2 + $0xb8] sm:$0xff]
    %v56 = vld [vmem:[%s2 + $0xc0] sm:$0xff]
    %v57 = vld [vmem:[%s2 + $0xc8] sm:$0xff]
    %v58 = vld [vmem:[%s2 + $0xd0] sm:$0xff]
    %v59 = vld [vmem:[%s2 + $0xd8] sm:$0xff]
    %v60 = vld [vmem:[%s2 + $0xe0] sm:$0xff]
    %v61 = vld [vmem:[%s2 + $0xe8] sm:$0xff]
    %v62 = vld [vmem:[%s2 + $0xf0] sm:$0xff]
    %v63 = vld [vmem:[%s2 + $0xf8] sm:$0xff]
    %v64 = vld [vmem:[%s2 + $0x100] sm:$0xff]
    %v65 = vld [vmem:[%s2 + $0x108] sm:$0xff]
    %v66 = vld [vmem:[%s2 + $0x110] sm:$0xff]
    %v67 = vld [vmem:[%s2 + $0x118] sm:$0xff]
    %v68 = vld [vmem:[%s2 + $0x120] sm:$0xff]
    %v69 = vld [vmem:[%s2 + $0x128] sm:$0xff]
    %v70 = vld [vmem:[%s2 + $0x130] sm:$0xff]
    %v71 = vld [vmem:[%s2 + $0x138] sm:$0xff]
    %v72 = vld [vmem:[%s2 + $0x140] sm:$0xff]
    %v73 = vld [vmem:[%s2 + $0x148] sm:$0xff]
    %v74 = vld [vmem:[%s2 + $0x150] sm:$0xff]
    %v75 = vld [vmem:[%s2 + $0x158] sm:$0xff]
    %v76 = vld [vmem:[%s2 + $0x160] sm:$0xff]
    %v77 = vld [vmem:[%s2 + $0x168] sm:$0xff]
    %v78 = vld [vmem:[%s2 + $0x170] sm:$0xff]
    %v79 = vld [vmem:[%s2 + $0x178] sm:$0xff]
    %v80 = vld [vmem:[%s3] sm:$0x3f]
    %v82 = vlaneseq
    %v83 = vshrl.u32 %v82, 7
    %v84 = vsub.s32 0, %v83
    %v85 = vrot.slane %v80, %v84
    %v86 = vlaneseq
    %v87 = vshrl.u32 %v86, 7
    %v88 = vsub.s32 1, %v87
    %v89 = vrot.slane %v80, %v88
    %v90 = vlaneseq
    %v91 = vshrl.u32 %v90, 7
    %v92 = vsub.s32 2, %v91
    %v93 = vrot.slane %v80, %v92
    %v94 = vlaneseq
    %v95 = vshrl.u32 %v94, 7
    %v96 = vsub.s32 3, %v95
    %v97 = vrot.slane %v80, %v96
    %v98 = vlaneseq
    %v99 = vshrl.u32 %v98, 7
    %v100 = vsub.s32 4, %v99
    %v101 = vrot.slane %v80, %v100
    %v102 = vlaneseq
    %v103 = vshrl.u32 %v102, 7
    %v104 = vsub.s32 5, %v103
    %v105 = vrot.slane %v80, %v104
    %v160 = vunpack.c.l.b16 %v32
    %v161 = vunpack.c.h.b16 %v32
    %v162 = vunpack.c.l.b16 %v33
    %v163 = vunpack.c.h.b16 %v33
    %v164 = vunpack.c.l.b16 %v34
    %v165 = vunpack.c.h.b16 %v34
    %v166 = vunpack.c.l.b16 %v35
    %v167 = vunpack.c.h.b16 %v35
    %v168 = vunpack.c.l.b16 %v36
    %v169 = vunpack.c.h.b16 %v36
    %v170 = vunpack.c.l.b16 %v37
    %v171 = vunpack.c.h.b16 %v37
    %v172 = vunpack.c.l.b16 %v38
    %v173 = vunpack.c.h.b16 %v38
    %v174 = vunpack.c.l.b16 %v39
    %v175 = vunpack.c.h.b16 %v39
    %v176 = vunpack.c.l.b16 %v40
    %v177 = vunpack.c.h.b16 %v40
    %v178 = vunpack.c.l.b16 %v41
    %v179 = vunpack.c.h.b16 %v41
    %v180 = vunpack.c.l.b16 %v42
    %v181 = vunpack.c.h.b16 %v42
    %v182 = vunpack.c.l.b16 %v43
    %v183 = vunpack.c.h.b16 %v43
    %v184 = vunpack.c.l.b16 %v44
    %v185 = vunpack.c.h.b16 %v44
    %v186 = vunpack.c.l.b16 %v45
    %v187 = vunpack.c.h.b16 %v45
    %v188 = vunpack.c.l.b16 %v46
    %v189 = vunpack.c.h.b16 %v46
    %v190 = vunpack.c.l.b16 %v47
    %v191 = vunpack.c.h.b16 %v47
    %v192 = vunpack.c.l.b16 %v48
    %v193 = vunpack.c.h.b16 %v48
    %v194 = vunpack.c.l.b16 %v49
    %v195 = vunpack.c.h.b16 %v49
    %v196 = vunpack.c.l.b16 %v50
    %v197 = vunpack.c.h.b16 %v50
    %v198 = vunpack.c.l.b16 %v51
    %v199 = vunpack.c.h.b16 %v51
    %v200 = vunpack.c.l.b16 %v52
    %v201 = vunpack.c.h.b16 %v52
    %v202 = vunpack.c.l.b16 %v53
    %v203 = vunpack.c.h.b16 %v53
    %v204 = vunpack.c.l.b16 %v54
    %v205 = vunpack.c.h.b16 %v54
    %v206 = vunpack.c.l.b16 %v55
    %v207 = vunpack.c.h.b16 %v55
    %v208 = vunpack.c.l.b16 %v56
    %v209 = vunpack.c.h.b16 %v56
    %v210 = vunpack.c.l.b16 %v57
    %v211 = vunpack.c.h.b16 %v57
    %v212 = vunpack.c.l.b16 %v58
    %v213 = vunpack.c.h.b16 %v58
    %v214 = vunpack.c.l.b16 %v59
    %v215 = vunpack.c.h.b16 %v59
    %v216 = vunpack.c.l.b16 %v60
    %v217 = vunpack.c.h.b16 %v60
    %v218 = vunpack.c.l.b16 %v61
    %v219 = vunpack.c.h.b16 %v61
    %v220 = vunpack.c.l.b16 %v62
    %v221 = vunpack.c.h.b16 %v62
    %v222 = vunpack.c.l.b16 %v63
    %v223 = vunpack.c.h.b16 %v63
    %v224 = vunpack.c.l.b16 %v64
    %v225 = vunpack.c.h.b16 %v64
    %v226 = vunpack.c.l.b16 %v65
    %v227 = vunpack.c.h.b16 %v65
    %v228 = vunpack.c.l.b16 %v66
    %v229 = vunpack.c.h.b16 %v66
    %v230 = vunpack.c.l.b16 %v67
    %v231 = vunpack.c.h.b16 %v67
    %v232 = vunpack.c.l.b16 %v68
    %v233 = vunpack.c.h.b16 %v68
    %v234 = vunpack.c.l.b16 %v69
    %v235 = vunpack.c.h.b16 %v69
    %v236 = vunpack.c.l.b16 %v70
    %v237 = vunpack.c.h.b16 %v70
    %v238 = vunpack.c.l.b16 %v71
    %v239 = vunpack.c.h.b16 %v71
    %v240 = vunpack.c.l.b16 %v72
    %v241 = vunpack.c.h.b16 %v72
    %v242 = vunpack.c.l.b16 %v73
    %v243 = vunpack.c.h.b16 %v73
    %v244 = vunpack.c.l.b16 %v74
    %v245 = vunpack.c.h.b16 %v74
    %v246 = vunpack.c.l.b16 %v75
    %v247 = vunpack.c.h.b16 %v75
    %v248 = vunpack.c.l.b16 %v76
    %v249 = vunpack.c.h.b16 %v76
    %v250 = vunpack.c.l.b16 %v77
    %v251 = vunpack.c.h.b16 %v77
    %v252 = vunpack.c.l.b16 %v78
    %v253 = vunpack.c.h.b16 %v78
    %v254 = vunpack.c.l.b16 %v79
    %v255 = vunpack.c.h.b16 %v79
    %v256 = vpack.c.b16 %v166, %v160
    %v257 = vpack.c.b16 %v167, %v161
    %v258 = vpack.c.b16 %v168, %v162
    %v259 = vpack.c.b16 %v169, %v163
    %v260 = vpack.c.b16 %v170, %v164
    %v261 = vpack.c.b16 %v171, %v165
    %v262 = vpack.c.b16 %v178, %v172
    %v263 = vpack.c.b16 %v179, %v173
    %v264 = vpack.c.b16 %v180, %v174
    %v265 = vpack.c.b16 %v181, %v175
    %v266 = vpack.c.b16 %v182, %v176
    %v267 = vpack.c.b16 %v183, %v177
    %v268 = vpack.c.b16 %v190, %v184
    %v269 = vpack.c.b16 %v191, %v185
    %v270 = vpack.c.b16 %v192, %v186
    %v271 = vpack.c.b16 %v193, %v187
    %v272 = vpack.c.b16 %v194, %v188
    %v273 = vpack.c.b16 %v195, %v189
    %v274 = vpack.c.b16 %v202, %v196
    %v275 = vpack.c.b16 %v203, %v197
    %v276 = vpack.c.b16 %v204, %v198
    %v277 = vpack.c.b16 %v205, %v199
    %v278 = vpack.c.b16 %v206, %v200
    %v279 = vpack.c.b16 %v207, %v201
    %v280 = vpack.c.b16 %v214, %v208
    %v281 = vpack.c.b16 %v215, %v209
    %v282 = vpack.c.b16 %v216, %v210
    %v283 = vpack.c.b16 %v217, %v211
    %v284 = vpack.c.b16 %v218, %v212
    %v285 = vpack.c.b16 %v219, %v213
    %v286 = vpack.c.b16 %v226, %v220
    %v287 = vpack.c.b16 %v227, %v221
    %v288 = vpack.c.b16 %v228, %v222
    %v289 = vpack.c.b16 %v229, %v223
    %v290 = vpack.c.b16 %v230, %v224
    %v291 = vpack.c.b16 %v231, %v225
    %v292 = vpack.c.b16 %v238, %v232
    %v293 = vpack.c.b16 %v239, %v233
    %v294 = vpack.c.b16 %v240, %v234
    %v295 = vpack.c.b16 %v241, %v235
    %v296 = vpack.c.b16 %v242, %v236
    %v297 = vpack.c.b16 %v243, %v237
    %v298 = vpack.c.b16 %v250, %v244
    %v299 = vpack.c.b16 %v251, %v245
    %v300 = vpack.c.b16 %v252, %v246
    %v301 = vpack.c.b16 %v253, %v247
    %v302 = vpack.c.b16 %v254, %v248
    %v303 = vpack.c.b16 %v255, %v249
    %352 = vmatprep.subr.bf16.mxu0 %v257
    %353 = vmatpush1.bf16.msra.mxu0 %v256
    %354 = vmatprep.subr.bf16.mxu0 %v263
    %355 = vmatpush1.bf16.msra.mxu0 %v262
    %356 = vmatprep.subr.bf16.mxu0 %v269
    %357 = vmatpush1.bf16.msra.mxu0 %v268
    %358 = vmatprep.subr.bf16.mxu0 %v275
    %359 = vmatpush1.bf16.msra.mxu0 %v274
    %360 = vmatprep.subr.bf16.mxu0 %v281
    %361 = vmatpush1.bf16.msra.mxu0 %v280
    %362 = vmatprep.subr.bf16.mxu0 %v287
    %363 = vmatpush1.bf16.msra.mxu0 %v286
    %364 = vmatprep.subr.bf16.mxu0 %v293
    %365 = vmatpush1.bf16.msra.mxu0 %v292
    %366 = vmatprep.subr.bf16.mxu0 %v299
    %367 = vmatpush1.bf16.msra.mxu0 %v298
    %368 = vmatprep.subr.bf16.mxu0 0
    %369 = vmatpush1.bf16.msra.mxu0 0
    %370 = vmatprep.subr.bf16.mxu0 0
    %371 = vmatpush1.bf16.msra.mxu0 0
    %372 = vmatprep.subr.bf16.mxu0 0
    %373 = vmatpush1.bf16.msra.mxu0 0
    %374 = vmatprep.subr.bf16.mxu0 0
    %375 = vmatpush1.bf16.msra.mxu0 0
    %376 = vmatprep.subr.bf16.mxu0 0
    %377 = vmatpush1.bf16.msra.mxu0 0
    %378 = vmatprep.subr.bf16.mxu0 0
    %379 = vmatpush1.bf16.msra.mxu0 0
    %380 = vmatprep.subr.bf16.mxu0 0
    %381 = vmatpush1.bf16.msra.mxu0 0
    %382 = vmatprep.subr.bf16.mxu0 0
    %383 = vmatpush1.bf16.msra.mxu0 0
    %384 = vmatprep.mubr.bf16.mxu0 0
    %385 = vmatmul.mubr.bf16.gmra.mrb[0].mxu0 %v31
    %v386 = vpop.f32.mrb[0].mxu0
    %v387 = vadd.f32 %v85, %v386
    %v388 = vpop.f32.mrb[0].mxu0
    %v389 = vadd.f32 %v89, %v388
    %v390 = vpop.f32.mrb[0].mxu0
    %v391 = vpop.f32.mrb[0].mxu0
    %392 = vdwg.mxu0
    %393 = vmatprep.subr.bf16.mxu0 %v259
    %394 = vmatpush1.bf16.msra.mxu0 %v258
    %395 = vmatprep.subr.bf16.mxu0 %v265
    %396 = vmatpush1.bf16.msra.mxu0 %v264
    %397 = vmatprep.subr.bf16.mxu0 %v271
    %398 = vmatpush1.bf16.msra.mxu0 %v270
    %399 = vmatprep.subr.bf16.mxu0 %v277
    %400 = vmatpush1.bf16.msra.mxu0 %v276
    %401 = vmatprep.subr.bf16.mxu0 %v283
    %402 = vmatpush1.bf16.msra.mxu0 %v282
    %403 = vmatprep.subr.bf16.mxu0 %v289
    %404 = vmatpush1.bf16.msra.mxu0 %v288
    %405 = vmatprep.subr.bf16.mxu0 %v295
    %406 = vmatpush1.bf16.msra.mxu0 %v294
    %407 = vmatprep.subr.bf16.mxu0 %v301
    %408 = vmatpush1.bf16.msra.mxu0 %v300
    %409 = vmatprep.subr.bf16.mxu0 0
    %410 = vmatpush1.bf16.msra.mxu0 0
    %411 = vmatprep.subr.bf16.mxu0 0
    %412 = vmatpush1.bf16.msra.mxu0 0
    %413 = vmatprep.subr.bf16.mxu0 0
    %414 = vmatpush1.bf16.msra.mxu0 0
    %415 = vmatprep.subr.bf16.mxu0 0
    %416 = vmatpush1.bf16.msra.mxu0 0
    %417 = vmatprep.subr.bf16.mxu0 0
    %418 = vmatpush1.bf16.msra.mxu0 0
    %419 = vmatprep.subr.bf16.mxu0 0
    %420 = vmatpush1.bf16.msra.mxu0 0
    %421 = vmatprep.subr.bf16.mxu0 0
    %422 = vmatpush1.bf16.msra.mxu0 0
    %423 = vmatprep.subr.bf16.mxu0 0
    %424 = vmatpush1.bf16.msra.mxu0 0
    %425 = vmatprep.mubr.bf16.mxu0 0
    %426 = vmatmul.mubr.bf16.gmra.mrb[0].mxu0 %v31
    %v427 = vpop.f32.mrb[0].mxu0
    %v428 = vadd.f32 %v93, %v427
    %v429 = vpop.f32.mrb[0].mxu0
    %v430 = vadd.f32 %v97, %v429
    %v431 = vpop.f32.mrb[0].mxu0
    %v432 = vpop.f32.mrb[0].mxu0
    %433 = vdwg.mxu0
    %434 = vmatprep.subr.bf16.mxu0 %v261
    %435 = vmatpush1.bf16.msra.mxu0 %v260
    %436 = vmatprep.subr.bf16.mxu0 %v267
    %437 = vmatpush1.bf16.msra.mxu0 %v266
    %438 = vmatprep.subr.bf16.mxu0 %v273
    %439 = vmatpush1.bf16.msra.mxu0 %v272
    %440 = vmatprep.subr.bf16.mxu0 %v279
    %441 = vmatpush1.bf16.msra.mxu0 %v278
    %442 = vmatprep.subr.bf16.mxu0 %v285
    %443 = vmatpush1.bf16.msra.mxu0 %v284
    %444 = vmatprep.subr.bf16.mxu0 %v291
    %445 = vmatpush1.bf16.msra.mxu0 %v290
    %446 = vmatprep.subr.bf16.mxu0 %v297
    %447 = vmatpush1.bf16.msra.mxu0 %v296
    %448 = vmatprep.subr.bf16.mxu0 %v303
    %449 = vmatpush1.bf16.msra.mxu0 %v302
    %450 = vmatprep.subr.bf16.mxu0 0
    %451 = vmatpush1.bf16.msra.mxu0 0
    %452 = vmatprep.subr.bf16.mxu0 0
    %453 = vmatpush1.bf16.msra.mxu0 0
    %454 = vmatprep.subr.bf16.mxu0 0
    %455 = vmatpush1.bf16.msra.mxu0 0
    %456 = vmatprep.subr.bf16.mxu0 0
    %457 = vmatpush1.bf16.msra.mxu0 0
    %458 = vmatprep.subr.bf16.mxu0 0
    %459 = vmatpush1.bf16.msra.mxu0 0
    %460 = vmatprep.subr.bf16.mxu0 0
    %461 = vmatpush1.bf16.msra.mxu0 0
    %462 = vmatprep.subr.bf16.mxu0 0
    %463 = vmatpush1.bf16.msra.mxu0 0
    %464 = vmatprep.subr.bf16.mxu0 0
    %465 = vmatpush1.bf16.msra.mxu0 0
    %466 = vmatprep.mubr.bf16.mxu0 0
    %467 = vmatmul.mubr.bf16.gmra.mrb[0].mxu0 %v31
    %v468 = vpop.f32.mrb[0].mxu0
    %v469 = vadd.f32 %v101, %v468
    %v470 = vpop.f32.mrb[0].mxu0
    %v471 = vadd.f32 %v105, %v470
    %v472 = vpop.f32.mrb[0].mxu0
    %v473 = vpop.f32.mrb[0].mxu0
    %474 = vdwg.mxu0
    %vm475 = vcmask 1041408
    %v476 = vsel %vm475, %v387, 0.0
    %v477 = vsel %vm475, %v389, 0.0
    %v478 = vadd.f32 %v476, %v477
    %v479 = vsel %vm475, %v428, 0.0
    %v480 = vadd.f32 %v478, %v479
    %v481 = vsel %vm475, %v430, 0.0
    %v482 = vadd.f32 %v480, %v481
    %v483 = vsel %vm475, %v469, 0.0
    %v484 = vadd.f32 %v482, %v483
    %v485 = vsel %vm475, %v471, 0.0
    %v486 = vadd.f32 %v484, %v485
    %487 = vadd.xlane.f32.xlu0 %v486
    %v488 = vpop.xlane.xlu0 %487
    %v489 = vrcp.pop 768.0
    %v490 = vmul.f32 %v488, %v489
    %v491 = vsub.f32 %v387, %v490
    %v492 = vsub.f32 %v389, %v490
    %v493 = vsub.f32 %v428, %v490
    %v494 = vsub.f32 %v430, %v490
    %v495 = vsub.f32 %v469, %v490
    %v496 = vsub.f32 %v471, %v490
    %v497 = vmul.f32 %v491, %v491
    %v498 = vmul.f32 %v492, %v492
    %v499 = vmul.f32 %v493, %v493
    %v500 = vmul.f32 %v494, %v494
    %v501 = vmul.f32 %v495, %v495
    %v502 = vmul.f32 %v496, %v496
    %v503 = vsel %vm475, %v497, 0.0
    %v504 = vsel %vm475, %v498, 0.0
    %v505 = vadd.f32 %v503, %v504
    %v506 = vsel %vm475, %v499, 0.0
    %v507 = vadd.f32 %v505, %v506
    %v508 = vsel %vm475, %v500, 0.0
    %v509 = vadd.f32 %v507, %v508
    %v510 = vsel %vm475, %v501, 0.0
    %v511 = vadd.f32 %v509, %v510
    %v512 = vsel %vm475, %v502, 0.0
    %v513 = vadd.f32 %v511, %v512
    %514 = vadd.xlane.f32.xlu0 %v513
    %v515 = vpop.xlane.xlu0 %514
    %v516 = vmul.f32 %v515, %v489
    %v517 = vadd.f32 %v516, 1e-05
    %v518 = vrsqrt.pop %v517
    %v519 = vmul.f32 %v491, %v518
    %v520 = vmul.f32 %v492, %v518
    %v521 = vmul.f32 %v493, %v518
    %v522 = vmul.f32 %v494, %v518
    %v523 = vmul.f32 %v495, %v518
    %v524 = vmul.f32 %v496, %v518
    %v525 = vld [vmem:[%s4] sm:$0x3f]
    %v527 = vlaneseq
    %v528 = vshrl.u32 %v527, 7
    %v529 = vsub.s32 0, %v528
    %v530 = vrot.slane %v525, %v529
    %v531 = vlaneseq
    %v532 = vshrl.u32 %v531, 7
    %v533 = vsub.s32 1, %v532
    %v534 = vrot.slane %v525, %v533
    %v535 = vlaneseq
    %v536 = vshrl.u32 %v535, 7
    %v537 = vsub.s32 2, %v536
    %v538 = vrot.slane %v525, %v537
    %v539 = vlaneseq
    %v540 = vshrl.u32 %v539, 7
    %v541 = vsub.s32 3, %v540
    %v542 = vrot.slane %v525, %v541
    %v543 = vlaneseq
    %v544 = vshrl.u32 %v543, 7
    %v545 = vsub.s32 4, %v544
    %v546 = vrot.slane %v525, %v545
    %v547 = vlaneseq
    %v548 = vshrl.u32 %v547, 7
    %v549 = vsub.s32 5, %v548
    %v550 = vrot.slane %v525, %v549
    %v557 = vmul.f32 %v519, %v530
    %v558 = vmul.f32 %v520, %v534
    %v559 = vmul.f32 %v521, %v538
    %v560 = vmul.f32 %v522, %v542
    %v561 = vmul.f32 %v523, %v546
    %v562 = vmul.f32 %v524, %v550
    %v563 = vld [vmem:[%s5] sm:$0x3f]
    %v565 = vlaneseq
    %v566 = vshrl.u32 %v565, 7
    %v567 = vsub.s32 0, %v566
    %v568 = vrot.slane %v563, %v567
    %v569 = vlaneseq
    %v570 = vshrl.u32 %v569, 7
    %v571 = vsub.s32 1, %v570
    %v572 = vrot.slane %v563, %v571
    %v573 = vlaneseq
    %v574 = vshrl.u32 %v573, 7
    %v575 = vsub.s32 2, %v574
    %v576 = vrot.slane %v563, %v575
    %v577 = vlaneseq
    %v578 = vshrl.u32 %v577, 7
    %v579 = vsub.s32 3, %v578
    %v580 = vrot.slane %v563, %v579
    %v581 = vlaneseq
    %v582 = vshrl.u32 %v581, 7
    %v583 = vsub.s32 4, %v582
    %v584 = vrot.slane %v563, %v583
    %v585 = vlaneseq
    %v586 = vshrl.u32 %v585, 7
    %v587 = vsub.s32 5, %v586
    %v588 = vrot.slane %v563, %v587
    %v595 = vadd.f32 %v557, %v568
    %v596 = vadd.f32 %v558, %v572
    %v597 = vadd.f32 %v559, %v576
    %v598 = vadd.f32 %v560, %v580
    %v599 = vadd.f32 %v561, %v584
    %v600 = vadd.f32 %v562, %v588
    %v601 = vld [vmem:[%s1] sm:$0xf]
    %602 = vmatprep.subr.bf16.mxu0 %v257
    %603 = vmatpush1.bf16.msra.mxu0 %v256
    %604 = vmatprep.subr.bf16.mxu0 %v263
    %605 = vmatpush1.bf16.msra.mxu0 %v262
    %606 = vmatprep.subr.bf16.mxu0 %v269
    %607 = vmatpush1.bf16.msra.mxu0 %v268
    %608 = vmatprep.subr.bf16.mxu0 %v275
    %609 = vmatpush1.bf16.msra.mxu0 %v274
    %610 = vmatprep.subr.bf16.mxu0 %v281
    %611 = vmatpush1.bf16.msra.mxu0 %v280
    %612 = vmatprep.subr.bf16.mxu0 %v287
    %613 = vmatpush1.bf16.msra.mxu0 %v286
    %614 = vmatprep.subr.bf16.mxu0 %v293
    %615 = vmatpush1.bf16.msra.mxu0 %v292
    %616 = vmatprep.subr.bf16.mxu0 %v299
    %617 = vmatpush1.bf16.msra.mxu0 %v298
    %618 = vmatprep.subr.bf16.mxu0 0
    %619 = vmatpush1.bf16.msra.mxu0 0
    %620 = vmatprep.subr.bf16.mxu0 0
    %621 = vmatpush1.bf16.msra.mxu0 0
    %622 = vmatprep.subr.bf16.mxu0 0
    %623 = vmatpush1.bf16.msra.mxu0 0
    %624 = vmatprep.subr.bf16.mxu0 0
    %625 = vmatpush1.bf16.msra.mxu0 0
    %626 = vmatprep.subr.bf16.mxu0 0
    %627 = vmatpush1.bf16.msra.mxu0 0
    %628 = vmatprep.subr.bf16.mxu0 0
    %629 = vmatpush1.bf16.msra.mxu0 0
    %630 = vmatprep.subr.bf16.mxu0 0
    %631 = vmatpush1.bf16.msra.mxu0 0
    %632 = vmatprep.subr.bf16.mxu0 0
    %633 = vmatpush1.bf16.msra.mxu0 0
    %634 = vmatprep.mubr.bf16.mxu0 0
    %635 = vmatmul.mubr.bf16.gmra.mrb[0].mxu0 %v601
    %v636 = vpop.f32.mrb[0].mxu0
    %v637 = vadd.f32 %v85, %v636
    %v638 = vpop.f32.mrb[0].mxu0
    %v639 = vadd.f32 %v89, %v638
    %v640 = vpop.f32.mrb[0].mxu0
    %v641 = vpop.f32.mrb[0].mxu0
    %642 = vdwg.mxu0
    %643 = vmatprep.subr.bf16.mxu0 %v259
    %644 = vmatpush1.bf16.msra.mxu0 %v258
    %645 = vmatprep.subr.bf16.mxu0 %v265
    %646 = vmatpush1.bf16.msra.mxu0 %v264
    %647 = vmatprep.subr.bf16.mxu0 %v271
    %648 = vmatpush1.bf16.msra.mxu0 %v270
    %649 = vmatprep.subr.bf16.mxu0 %v277
    %650 = vmatpush1.bf16.msra.mxu0 %v276
    %651 = vmatprep.subr.bf16.mxu0 %v283
    %652 = vmatpush1.bf16.msra.mxu0 %v282
    %653 = vmatprep.subr.bf16.mxu0 %v289
    %654 = vmatpush1.bf16.msra.mxu0 %v288
    %655 = vmatprep.subr.bf16.mxu0 %v295
    %656 = vmatpush1.bf16.msra.mxu0 %v294
    %657 = vmatprep.subr.bf16.mxu0 %v301
    %658 = vmatpush1.bf16.msra.mxu0 %v300
    %659 = vmatprep.subr.bf16.mxu0 0
    %660 = vmatpush1.bf16.msra.mxu0 0
    %661 = vmatprep.subr.bf16.mxu0 0
    %662 = vmatpush1.bf16.msra.mxu0 0
    %663 = vmatprep.subr.bf16.mxu0 0
    %664 = vmatpush1.bf16.msra.mxu0 0
    %665 = vmatprep.subr.bf16.mxu0 0
    %666 = vmatpush1.bf16.msra.mxu0 0
    %667 = vmatprep.subr.bf16.mxu0 0
    %668 = vmatpush1.bf16.msra.mxu0 0
    %669 = vmatprep.subr.bf16.mxu0 0
    %670 = vmatpush1.bf16.msra.mxu0 0
    %671 = vmatprep.subr.bf16.mxu0 0
    %672 = vmatpush1.bf16.msra.mxu0 0
    %673 = vmatprep.subr.bf16.mxu0 0
    %674 = vmatpush1.bf16.msra.mxu0 0
    %675 = vmatprep.mubr.bf16.mxu0 0
    %676 = vmatmul.mubr.bf16.gmra.mrb[0].mxu0 %v601
    %v677 = vpop.f32.mrb[0].mxu0
    %v678 = vadd.f32 %v93, %v677
    %v679 = vpop.f32.mrb[0].mxu0
    %v680 = vadd.f32 %v97, %v679
    %v681 = vpop.f32.mrb[0].mxu0
    %v682 = vpop.f32.mrb[0].mxu0
    %683 = vdwg.mxu0
    %684 = vmatprep.subr.bf16.mxu0 %v261
    %685 = vmatpush1.bf16.msra.mxu0 %v260
    %686 = vmatprep.subr.bf16.mxu0 %v267
    %687 = vmatpush1.bf16.msra.mxu0 %v266
    %688 = vmatprep.subr.bf16.mxu0 %v273
    %689 = vmatpush1.bf16.msra.mxu0 %v272
    %690 = vmatprep.subr.bf16.mxu0 %v279
    %691 = vmatpush1.bf16.msra.mxu0 %v278
    %692 = vmatprep.subr.bf16.mxu0 %v285
    %693 = vmatpush1.bf16.msra.mxu0 %v284
    %694 = vmatprep.subr.bf16.mxu0 %v291
    %695 = vmatpush1.bf16.msra.mxu0 %v290
    %696 = vmatprep.subr.bf16.mxu0 %v297
    %697 = vmatpush1.bf16.msra.mxu0 %v296
    %698 = vmatprep.subr.bf16.mxu0 %v303
    %699 = vmatpush1.bf16.msra.mxu0 %v302
    %700 = vmatprep.subr.bf16.mxu0 0
    %701 = vmatpush1.bf16.msra.mxu0 0
    %702 = vmatprep.subr.bf16.mxu0 0
    %703 = vmatpush1.bf16.msra.mxu0 0
    %704 = vmatprep.subr.bf16.mxu0 0
    %705 = vmatpush1.bf16.msra.mxu0 0
    %706 = vmatprep.subr.bf16.mxu0 0
    %707 = vmatpush1.bf16.msra.mxu0 0
    %708 = vmatprep.subr.bf16.mxu0 0
    %709 = vmatpush1.bf16.msra.mxu0 0
    %710 = vmatprep.subr.bf16.mxu0 0
    %711 = vmatpush1.bf16.msra.mxu0 0
    %712 = vmatprep.subr.bf16.mxu0 0
    %713 = vmatpush1.bf16.msra.mxu0 0
    %714 = vmatprep.subr.bf16.mxu0 0
    %715 = vmatpush1.bf16.msra.mxu0 0
    %716 = vmatprep.mubr.bf16.mxu0 0
    %717 = vmatmul.mubr.bf16.gmra.mrb[0].mxu0 %v601
    %v718 = vpop.f32.mrb[0].mxu0
    %v719 = vadd.f32 %v101, %v718
    %v720 = vpop.f32.mrb[0].mxu0
    %v721 = vadd.f32 %v105, %v720
    %v722 = vpop.f32.mrb[0].mxu0
    %v723 = vpop.f32.mrb[0].mxu0
    %724 = vdwg.mxu0
    %v725 = vadd.f32 %v637, %v639
    %v726 = vadd.f32 %v725, %v678
    %v727 = vadd.f32 %v726, %v680
    %v728 = vadd.f32 %v727, %v719
    %v729 = vadd.f32 %v728, %v721
    %730 = vadd.xlane.f32.xlu0 %v729
    %v731 = vpop.xlane.xlu0 %730
    %v732 = vmul.f32 %v731, %v489
    %v733 = vsub.f32 %v637, %v732
    %v734 = vsub.f32 %v639, %v732
    %v735 = vsub.f32 %v678, %v732
    %v736 = vsub.f32 %v680, %v732
    %v737 = vsub.f32 %v719, %v732
    %v738 = vsub.f32 %v721, %v732
    %v739 = vmul.f32 %v733, %v733
    %v740 = vmul.f32 %v734, %v734
    %v741 = vmul.f32 %v735, %v735
    %v742 = vmul.f32 %v736, %v736
    %v743 = vmul.f32 %v737, %v737
    %v744 = vmul.f32 %v738, %v738
    %v745 = vadd.f32 %v739, %v740
    %v746 = vadd.f32 %v745, %v741
    %v747 = vadd.f32 %v746, %v742
    %v748 = vadd.f32 %v747, %v743
    %v749 = vadd.f32 %v748, %v744
    %750 = vadd.xlane.f32.xlu0 %v749
    %v751 = vpop.xlane.xlu0 %750
    %v752 = vmul.f32 %v751, %v489
    %v753 = vadd.f32 %v752, 1e-05
    %v754 = vrsqrt.pop %v753
    %v755 = vmul.f32 %v733, %v754
    %v756 = vmul.f32 %v734, %v754
    %v757 = vmul.f32 %v735, %v754
    %v758 = vmul.f32 %v736, %v754
    %v759 = vmul.f32 %v737, %v754
    %v760 = vmul.f32 %v738, %v754
    %v761 = vmul.f32 %v755, %v530
    %v762 = vmul.f32 %v756, %v534
    %v763 = vmul.f32 %v757, %v538
    %v764 = vmul.f32 %v758, %v542
    %v765 = vmul.f32 %v759, %v546
    %v766 = vmul.f32 %v760, %v550
    %v767 = vadd.f32 %v761, %v568
    %v768 = vadd.f32 %v762, %v572
    %v769 = vadd.f32 %v763, %v576
    %v770 = vadd.f32 %v764, %v580
    %v771 = vadd.f32 %v765, %v584
    %v772 = vadd.f32 %v766, %v588
    %v779 = vcombine.low %v595, %v596
    %v780 = vcombine.low %v597, %v598
    %v782 = vunpack.c.l.s4 1983009808
    %v783 = vunpack.c.0.s8 %v782
    %v784 = vlaneseq
    %v785 = vshrl.u32 %v784, 7
    %v786 = vsub.s32 %v783, %v785
    %v787 = vrot.slane %v779, %v786
    %v789 = vunpack.c.l.s4 1983009808
    %v790 = vunpack.c.0.s8 %v789
    %v791 = vlaneseq
    %v792 = vshrl.u32 %v791, 7
    %v793 = vsub.s32 %v790, %v792
    %v794 = vrot.slane %v780, %v793
    %v795 = vcombine.low %v787, %v794
    %v796 = vcombine.low %v599, %v600
    %v798 = vunpack.c.l.s4 1983009808
    %v799 = vunpack.c.0.s8 %v798
    %v800 = vlaneseq
    %v801 = vshrl.u32 %v800, 7
    %v802 = vsub.s32 %v799, %v801
    %v803 = vrot.slane %v796, %v802
    %806 = vst [vmem:[#allocation7] sm:$0xff] %v795
    %807 = vst [vmem:[#allocation7 + $0x8] sm:$0xf] %v803
    %808 = vst [vmem:[#allocation9] sm:$0xff] %v767
    %809 = vst [vmem:[#allocation9 + $0x8] sm:$0xff] %v768
    %810 = vst [vmem:[#allocation9 + $0x10] sm:$0xff] %v769
    %811 = vst [vmem:[#allocation9 + $0x18] sm:$0xff] %v770
    %812 = vst [vmem:[#allocation9 + $0x20] sm:$0xff] %v771
    %813 = vst [vmem:[#allocation9 + $0x28] sm:$0xff] %v772
    %v820 = vcombine.low %v767, %v768
    %v821 = vcombine.high %v767, %v768
    %v822 = vcombine.low %v769, %v770
    %v823 = vcombine.high %v769, %v770
    %v824 = vcombine.low %v771, %v772
    %v825 = vcombine.high %v771, %v772
    %v833 = vunpack.c.l.s4 1966171168
    %v834 = vunpack.c.0.s8 %v833
    %v835 = vlaneseq
    %v836 = vshrl.u32 %v835, 7
    %v837 = vsub.s32 %v834, %v836
    %v838 = vrot.slane %v779, %v837
    %v840 = vunpack.c.l.s4 1966171168
    %v841 = vunpack.c.0.s8 %v840
    %v842 = vlaneseq
    %v843 = vshrl.u32 %v842, 7
    %v844 = vsub.s32 %v841, %v843
    %v845 = vrot.slane %v780, %v844
    %v847 = vunpack.c.l.s4 1966171168
    %v848 = vunpack.c.0.s8 %v847
    %v849 = vlaneseq
    %v850 = vshrl.u32 %v849, 7
    %v851 = vsub.s32 %v848, %v850
    %v852 = vrot.slane %v796, %v851
    %v853 = vcombine.low %v838, %v845
    %v854 = vcombine.high %v838, %v845
    %v855 = vcombine.high %v852, %v852
    %v857 = vunpack.c.l.s4 1966171168
    %v858 = vunpack.c.0.s8 %v857
    %v859 = vlaneseq
    %v860 = vshrl.u32 %v859, 7
    %v861 = vsub.s32 %v858, %v860
    %v862 = vrot.slane %v853, %v861
    %v864 = vunpack.c.l.s4 1966171168
    %v865 = vunpack.c.0.s8 %v864
    %v866 = vlaneseq
    %v867 = vshrl.u32 %v866, 7
    %v868 = vsub.s32 %v865, %v867
    %v869 = vrot.slane %v854, %v868
    %v871 = vunpack.c.l.s4 1966171168
    %v872 = vunpack.c.0.s8 %v871
    %v873 = vlaneseq
    %v874 = vshrl.u32 %v873, 7
    %v875 = vsub.s32 %v872, %v874
    %v876 = vrot.slane %v852, %v875
    %v878 = vunpack.c.l.s4 1966171168
    %v879 = vunpack.c.0.s8 %v878
    %v880 = vlaneseq
    %v881 = vshrl.u32 %v880, 7
    %v882 = vsub.s32 %v879, %v881
    %v883 = vrot.slane %v855, %v882
    %v884 = vcombine.low %v862, %v876
    %v885 = vcombine.low %v869, %v883
    %v886 = vlaneseq
    %v887 = vshrl.u32 %v886, 7
    %v888 = vsub.s32 0, %v887
    %v889 = vrot.slane %v884, %v888
    %v890 = vlaneseq
    %v891 = vshrl.u32 %v890, 7
    %v892 = vsub.s32 1, %v891
    %v893 = vrot.slane %v884, %v892
    %v894 = vlaneseq
    %v895 = vshrl.u32 %v894, 7
    %v896 = vsub.s32 2, %v895
    %v897 = vrot.slane %v884, %v896
    %v898 = vlaneseq
    %v899 = vshrl.u32 %v898, 7
    %v900 = vsub.s32 3, %v899
    %v901 = vrot.slane %v884, %v900
    %v902 = vlaneseq
    %v903 = vshrl.u32 %v902, 7
    %v904 = vsub.s32 4, %v903
    %v905 = vrot.slane %v884, %v904
    %v906 = vlaneseq
    %v907 = vshrl.u32 %v906, 7
    %v908 = vsub.s32 5, %v907
    %v909 = vrot.slane %v884, %v908
    %v910 = vlaneseq
    %v911 = vshrl.u32 %v910, 7
    %v912 = vsub.s32 0, %v911
    %v913 = vrot.slane %v885, %v912
    %v914 = vlaneseq
    %v915 = vshrl.u32 %v914, 7
    %v916 = vsub.s32 1, %v915
    %v917 = vrot.slane %v885, %v916
    %v918 = vlaneseq
    %v919 = vshrl.u32 %v918, 7
    %v920 = vsub.s32 2, %v919
    %v921 = vrot.slane %v885, %v920
    %v922 = vlaneseq
    %v923 = vshrl.u32 %v922, 7
    %v924 = vsub.s32 3, %v923
    %v925 = vrot.slane %v885, %v924
    %v926 = vlaneseq
    %v927 = vshrl.u32 %v926, 7
    %v928 = vsub.s32 4, %v927
    %v929 = vrot.slane %v885, %v928
    %v930 = vlaneseq
    %v931 = vshrl.u32 %v930, 7
    %v932 = vsub.s32 5, %v931
    %v933 = vrot.slane %v885, %v932
    %v946 = vcombine.high %v820, %v820
    %v947 = vcombine.high %v822, %v822
    %v948 = vcombine.high %v824, %v824
    %v949 = vcombine.high %v821, %v821
    %v950 = vcombine.high %v823, %v823
    %v951 = vcombine.high %v825, %v825
    %v958 = vmul.f32 %v889, %v820
    %v959 = vmul.f32 %v893, %v946
    %v960 = vmul.f32 %v897, %v822
    %v961 = vmul.f32 %v901, %v947
    %v962 = vmul.f32 %v905, %v824
    %v963 = vmul.f32 %v909, %v948
    %v964 = vmul.f32 %v913, %v821
    %v965 = vmul.f32 %v917, %v949
    %v966 = vmul.f32 %v921, %v823
    %v967 = vmul.f32 %v925, %v950
    %v968 = vmul.f32 %v929, %v825
    %v969 = vmul.f32 %v933, %v951
    %vm970 = vcmask 1043456
    %v971 = vsel %vm970, %v958, 0.0
    %v972 = vsel %vm970, %v959, 0.0
    %v973 = vadd.f32 %v971, %v972
    %v974 = vsel %vm970, %v960, 0.0
    %v975 = vadd.f32 %v973, %v974
    %v976 = vsel %vm970, %v961, 0.0
    %v977 = vadd.f32 %v975, %v976
    %v978 = vsel %vm970, %v962, 0.0
    %v979 = vadd.f32 %v977, %v978
    %v980 = vsel %vm970, %v963, 0.0
    %v981 = vadd.f32 %v979, %v980
    %982 = vadd.xlane.f32.xlu0 %v981
    %v983 = vpop.xlane.xlu0 %982
    %v984 = vsel %vm970, %v964, 0.0
    %v985 = vsel %vm970, %v965, 0.0
    %v986 = vadd.f32 %v984, %v985
    %v987 = vsel %vm970, %v966, 0.0
    %v988 = vadd.f32 %v986, %v987
    %v989 = vsel %vm970, %v967, 0.0
    %v990 = vadd.f32 %v988, %v989
    %v991 = vsel %vm970, %v968, 0.0
    %v992 = vadd.f32 %v990, %v991
    %v993 = vsel %vm970, %v969, 0.0
    %v994 = vadd.f32 %v992, %v993
    %995 = vadd.xlane.f32.xlu0 %v994
    %v996 = vpop.xlane.xlu0 %995
    %997 = vst [vmem:[#allocation6] sm:$0x3] 0.0
    %v1000 = vlaneseq
    %v1001 = vand.u32 %v1000, 127
    %v1002 = vlaneseq
    %v1003 = vshrl.u32 %v1002, 7
    %v1004 = vsub.s32 %v1001, %v1003
    %v1005 = vrot.slane %v983, %v1004
    %v1006 = vlaneseq
    %v1007 = vshrl.u32 %v1006, 7
    %v1008 = vsub.s32 %v1001, %v1007
    %v1009 = vrot.slane %v996, %v1008
    %vm1010 = vcmask 1041409
    %v1011 = vsel %vm1010, %v1009, %v1005
    %vm1013 = vcmask 25600
    %1014 = vst.msk [vmem:[#allocation6] sm:$0x3] %vm1013, %v1011
    %v1015 = vsel %vm1013, %v1011, -inf
    %1016 = vmax.xlane.f32.xlu0 %v1015
    %v1017 = vpop.xlane.xlu0 %1016
    %v1019 = vlaneseq
    %v1020 = vshrl.u32 %v1019, 7
    %v1021 = vsub.s32 0, %v1020
    %v1022 = vrot.slane %v1017, %v1021
    %v1023 = vlaneseq
    %v1024 = vshrl.u32 %v1023, 7
    %v1025 = vsub.s32 1, %v1024
    %v1026 = vrot.slane %v1017, %v1025
    %v1029 = vsub.f32 %v983, %v1022
    %v1030 = vsub.f32 %v996, %v1026
    %v1031 = vmul.f32 %v1029, 1.442695
    %v1032 = vpow.pop %v1031
    %v1033 = vmul.f32 %v1030, 1.442695
    %v1034 = vpow.pop %v1033
    %1037 = vset.pattern.permute.xlu0 0
    %1038 = vperm.xlu0 %1037, %v1032
    %v1039 = vpop.permute.xlu0 %1038
    %1040 = vset.pattern.permute.xlu0 0
    %1041 = vperm.xlu0 %1040, %v1034
    %v1042 = vpop.permute.xlu0 %1041
    %v1043 = vlaneseq
    %v1044 = vshrl.u32 %v1043, 7
    %v1045 = vsub.s32 %v1001, %v1044
    %v1046 = vrot.slane %v1039, %v1045
    %v1047 = vlaneseq
    %v1048 = vshrl.u32 %v1047, 7
    %v1049 = vsub.s32 %v1001, %v1048
    %v1050 = vrot.slane %v1042, %v1049
    %v1051 = vsel %vm1010, %v1050, %v1046
    %v1053 = vsel %vm1013, %v1051, 0.0
    %1054 = vadd.xlane.f32.xlu0 %v1053
    %v1055 = vpop.xlane.xlu0 %1054
    %v1056 = vlog2.pop %v1055
    %v1057 = vmul.f32 %v1056, 0.6931472
    %v1058 = vadd.f32 %v1017, %v1057
    %v1059 = vrot.slane %v996, 7
    %v1060 = vsel %vm1010, %v1059, %v983
    %v1062 = vsub.f32 %v1058, %v1060
    %vm1063 = vcmask 1024
    %v1064 = vsel %vm1063, %v1062, 0.0
    %1065 = vadd.xlane.f32.xlu0 %v1064
    %v1066 = vpop.xlane.xlu0 %1065
    %v1067 = vrot.slane %v1066, 4
    %v1068 = vadd.f32 %v1066, %v1067
    %v1069 = vrot.slane %v1068, 2
    %v1070 = vadd.f32 %v1068, %v1069
    %v1071 = vrot.slane %v1070, 1
    %v1072 = vadd.f32 %v1070, %v1071
    %s1073 = vtos %v1072
    %v1074 = vstv %s1073
    %v1075 = vrcp.pop 2.0
    %v1076 = vmul.f32 %v1074, %v1075
    %vm1077 = vcmask 0
    %1078 = vst.msk [vmem:[#allocation2] sm:$0x1] %vm1077, %v1076
    %v1079 = vld [vmem:[#allocation2] sm:$0x1]
    %s1080 = vtos %v1079
    %s1081 = scalar_lea.smem [#allocation3], 0
    %1082 = sst [smem:[%s1081]] %s1080
    // Predicated region
    $region26: #{dense_model_forward.1} parent=1 // pred_check
      _
    $region27: #{dense_model_forward.1} parent=1 // pred_check_branch
      %1084 = sbr.rel (0) target = $region29
    $region28: #{dense_model_forward.1} parent=1 // pred_region
      %s1086 = ssub.s32 16, 16
      %1087 = vsyncadd [#allocation5], %s1086
      %1090 = dma.smem_to_hbm [#allocation3], 16, %s6, [#allocation5]
    $region29: #{dense_model_forward.1} parent=1 // pred_fallthru
      _
    // Predicated region
    $region30: #{dense_model_forward.1} parent=1 // pred_check
      _
    $region31: #{dense_model_forward.1} parent=1 // pred_check_branch
      %1092 = sbr.rel (0) target = $region33
    $region32: #{dense_model_forward.1} parent=1 // pred_region
      %s1094 = ssub.s32 32, 32
      %1095 = vsyncadd [#allocation4], %s1094
      %s1097 = sshll.u32 [#allocation6], 4
      %s1098 = int_to_ptr.vmem [resolvable:$true] %s1097
      %1100 = dma.vmem_to_hbm [thread:$0]  %s1098, 32, %s7, [#allocation4]
    $region33: #{dense_model_forward.1} parent=1 // pred_fallthru
      _
    // Predicated region
    $region34: #{dense_model_forward.1} parent=1 // pred_check
      _
    $region35: #{dense_model_forward.1} parent=1 // pred_check_branch
      %1102 = sbr.rel (0) target = $region37
    $region36: #{dense_model_forward.1} parent=1 // pred_region
      %s1104 = ssub.s32 192, 192
      %1105 = vsyncadd [#allocation8], %s1104
      %s1107 = sshll.u32 [#allocation7], 4
      %s1108 = int_to_ptr.vmem [resolvable:$true] %s1107
      %1110 = dma.vmem_to_hbm [thread:$0]  %s1108, 192, %s8, [#allocation8]
    $region37: #{dense_model_forward.1} parent=1 // pred_fallthru
      _
    // Predicated region
    $region38: #{dense_model_forward.1} parent=1 // pred_check
      _
    $region39: #{dense_model_forward.1} parent=1 // pred_check_branch
      %1112 = sbr.rel (0) target = $region41
    $region40: #{dense_model_forward.1} parent=1 // pred_region
      %s1114 = ssub.s32 768, 768
      %1115 = vsyncadd [#allocation8], %s1114
      %s1117 = sshll.u32 [#allocation9], 4
      %s1118 = int_to_ptr.vmem [resolvable:$true] %s1117
      %1120 = dma.vmem_to_hbm [thread:$0]  %s1118, 768, %s9, [#allocation8]
    $region41: #{dense_model_forward.1} parent=1 // pred_fallthru
      _
    // Predicated region
    $region42: #{dense_model_forward.1} parent=1 // pred_check
      _
    $region43: #{dense_model_forward.1} parent=1 // pred_check_branch
      %1122 = sbr.rel (0) target = $region45
    $region44: #{dense_model_forward.1} parent=1 // pred_region
      %1123 = dma.done [#allocation5], 16
    $region45: #{dense_model_forward.1} parent=1 // pred_fallthru
      _
    // Predicated region
    $region46: #{dense_model_forward.1} parent=1 // pred_check
      _
    $region47: #{dense_model_forward.1} parent=1 // pred_check_branch
      %1125 = sbr.rel (0) target = $region49
    $region48: #{dense_model_forward.1} parent=1 // pred_region
      %1126 = dma.done [#allocation4], 32
    $region49: #{dense_model_forward.1} parent=1 // pred_fallthru
      _
    // Predicated region
    $region50: #{dense_model_forward.1} parent=1 // pred_check
      _
    $region51: #{dense_model_forward.1} parent=1 // pred_check_branch
      %1128 = sbr.rel (0) target = $region53
    $region52: #{dense_model_forward.1} parent=1 // pred_region
      %1129 = dma.done [#allocation8], 192
    $region53: #{dense_model_forward.1} parent=1 // pred_fallthru
      _
    // Predicated region
    $region54: #{dense_model_forward.1} parent=1 // pred_check
      _
    $region55: #{dense_model_forward.1} parent=1 // pred_check_branch
      %1131 = sbr.rel (0) target = $region57
    $region56: #{dense_model_forward.1} parent=1 // pred_region
      %1132 = dma.done [#allocation8], 768
    $region57: #{dense_model_forward.1} parent=1 // pred_fallthru
      _
    %1133 = sfence
    %1134 = vsyncpa [#allocation4], 1
    %1135 = vsyncpa [#allocation8], 1
    %1136 = vsyncpa [#allocation5], 1

</llo_original>
